<compile_context>
chip_gen: v5e
topology: v5e:2x2
jax: 0.10.0
libtpu: 0.0.40
codegen_flags: <defaults>
</compile_context>

<pallas_src>
import functools

import numpy as np
import jax
import jax.numpy as jnp
from jax.experimental import pallas as pl
from jax.experimental.pallas import tpu as pltpu

LANE = 128


def _round_up(x, m):
    return ((x + m - 1) // m) * m


def _vmem_limit_bytes():
    # Generation-aware scoped-VMEM limit: ~3/4 of physical VMEM (v5e/v6e: 128 MiB -> 96 MiB,
    # v7x: 64 MiB -> 48 MiB), with a conservative fallback if the query is unavailable.
    try:
        cap = int(pltpu.get_tpu_info().vmem_capacity_bytes)
    except Exception:
        cap = 64 * 1024 * 1024
    return int(min(cap * 3 // 4, 100 * 1024 * 1024))


# ----------------------------------------------------------------------------------------------
# Kernel 1: streamed 3-tap time conv (+ReLU+1x1 conv) + length-masked mean/std/max pooling.
# grid = (B, num_time_tiles); the time axis is the innermost, sequential ("arbitrary") axis.
# ----------------------------------------------------------------------------------------------
def _conv_stats_kernel(t_len_ref,                            # scalar-prefetch: (B,) valid conv-output rows
                       x_ref,                                # (1, tt, F) streamed raw input tile
                       w0_ref, w1_ref, w2_ref, b1_ref,       # 3-tap conv: (F, F_PAD) per tap + (1, F_PAD)
                       wc_ref, b2_ref,                       # 1x1 conv: (F_PAD, F_PAD) + (1, F_PAD)
                       stats_ref,                            # out: (1, 1, S_PAD) pooled statistics
                       halo_ref, sum_acc, sumsq_acc, max_acc,  # VMEM scratch
                       *, include_mean, include_std, include_max, t_tile):
    b = pl.program_id(0)
    t_idx = pl.program_id(1)     # NOTE: time must remain the LAST (innermost) grid axis — the
                                 # halo / accumulator carries below rely on sequential t per item.

    @pl.when(t_idx == 0)
    def _():
        halo_ref[...] = jnp.zeros(halo_ref.shape, halo_ref.dtype)
        sum_acc[...] = jnp.zeros(sum_acc.shape, sum_acc.dtype)
        sumsq_acc[...] = jnp.zeros(sumsq_acc.shape, sumsq_acc.dtype)
        max_acc[...] = jnp.full(max_acc.shape, -jnp.inf, max_acc.dtype)

    # ---- 3-tap time conv from the raw tile + 2-row halo carried from the previous tile.
    # Conv output row r of this tile has global output index (t_idx*tt - 2 + r) and consumes
    # x rows [t_idx*tt - 2 + r .. t_idx*tt + r]; rows -2,-1 come from the halo (zeros at t==0).
    x_t = x_ref[0].astype(jnp.float32)                        # (tt, F), bf16 stream -> f32 math
    xw = jnp.concatenate([halo_ref[...], x_t], axis=0)        # (tt + 2, F)
    h1 = (jnp.dot(xw[0:t_tile], w0_ref[...], preferred_element_type=jnp.float32)
          + jnp.dot(xw[1:t_tile + 1], w1_ref[...], preferred_element_type=jnp.float32)
          + jnp.dot(xw[2:t_tile + 2], w2_ref[...], preferred_element_type=jnp.float32)
          + b1_ref[...])
    h1 = jnp.maximum(h1, 0.0)
    h2 = jnp.dot(h1, wc_ref[...], preferred_element_type=jnp.float32) + b2_ref[...]  # (tt, F_PAD)

    halo_ref[...] = x_t[t_tile - 2:t_tile]                    # carry for the next time tile

    # ---- length-masked streamed statistics (rows < 0: tile-0 warmup; rows >= t_valid: padding)
    t_valid = t_len_ref[b]
    rows = jax.lax.broadcasted_iota(jnp.int32, (t_tile, 1), 0) + (t_idx * t_tile - 2)
    mask = (rows >= 0) & (rows < t_valid)

    # TODO(synk): accumulate into (8, F_PAD) with a VPU-only reshape-add and collapse once in the
    # finalize to avoid the per-tile cross-sublane (XLU) reduction.
    h2_zero = jnp.where(mask, h2, 0.0)
    if include_mean or include_std:
        sum_acc[...] += jnp.sum(h2_zero, axis=0, keepdims=True)
    if include_std:
        sumsq_acc[...] += jnp.sum(h2_zero * h2_zero, axis=0, keepdims=True)
    if include_max:
        max_acc[...] = jnp.maximum(
            max_acc[...],
            jnp.max(jnp.where(mask, h2, -jnp.inf), axis=0, keepdims=True))

    # ---- finalize pooled statistics on the item's last time tile (stats never hit HBM per-frame)
    @pl.when(t_idx == pl.num_programs(1) - 1)
    def _():
        tc = t_valid.astype(jnp.float32)
        parts = []
        if include_mean or include_std:
            mean = sum_acc[...] / tc
        if include_mean:
            parts.append(mean)
        if include_std:
            # unbiased std (torch.std default), streamed one-pass form.
            # TODO(synk): one-pass form can cancel when |mean| >> std; switch to a per-tile
            # two-pass / Welford combine if that data regime matters.
            denom = jnp.maximum(tc - 1.0, 1.0)                # guard t_valid == 1 (torch gives NaN)
            var = (sumsq_acc[...] - sum_acc[...] * mean) / denom
            parts.append(jnp.sqrt(jnp.maximum(var, 0.0)))
        if include_max:
            parts.append(max_acc[...])
        stats_ref[0] = parts[0] if len(parts) == 1 else jnp.concatenate(parts, axis=1)


# ----------------------------------------------------------------------------------------------
# Kernel 2: segment-level 3-layer MLP over the whole batch (one small launch, full MXU M dim).
# ----------------------------------------------------------------------------------------------
def _mlp_kernel(s_ref, w1_ref, b1_ref, w2_ref, b2_ref, w3_ref, b3_ref, o_ref):
    h = jnp.dot(s_ref[...], w1_ref[...], preferred_element_type=jnp.float32) + b1_ref[...]
    h = jnp.maximum(h, 0.0)
    h = jnp.dot(h, w2_ref[...], preferred_element_type=jnp.float32) + b2_ref[...]
    h = jnp.maximum(h, 0.0)
    o_ref[...] = jnp.dot(h, w3_ref[...], preferred_element_type=jnp.float32) + b3_ref[...]


class ConvolutionFeatureProcessorPallas:
    HIDDEN = 256

    def __init__(self, feature_size, output_size,
                 include_mean=True, include_std=False, include_max=False,
                 key=jax.random.PRNGKey(42), time_tile=1024, stream_dtype=jnp.bfloat16):
        assert include_mean or include_std or include_max
        self.feature_size = F = feature_size
        self.output_size = output_size
        self.include_mean = include_mean
        self.include_std = include_std
        self.include_max = include_max
        self.time_tile = time_tile
        self.stream_dtype = stream_dtype

        self.n_stats = int(include_mean) + int(include_std) + int(include_max)
        self.stats_dim = self.n_stats * F
        self.F_PAD = _round_up(F, LANE)
        self.S_PAD = self.n_stats * self.F_PAD
        self.OUT_PAD = _round_up(output_size, LANE)

        H = self.HIDDEN
        k = jax.random.split(key, 10)

        def init(kk, shape, fan_in):
            return jax.random.normal(kk, shape, jnp.float32) / jnp.sqrt(float(fan_in))

        # td1: Conv2d(1, F, (3, F)) -> per-tap matmul weights (3, F_in, F_out)
        conv1_w = init(k[0], (F, 1, 3, F), 3 * F)                       # PyTorch OIHW
        self.w_td1 = jnp.transpose(conv1_w[:, 0, :, :], (1, 2, 0))      # (3, F, F)
        self.b_td1 = init(k[1], (1, F), 3 * F)
        # td2: Conv2d(1, F, (1, F)) -> (F_in, F_out)
        conv2_w = init(k[2], (F, 1, 1, F), F)
        self.w_td2 = jnp.transpose(conv2_w[:, 0, 0, :], (1, 0))         # (F, F)
        self.b_td2 = init(k[3], (1, F), F)
        # segment-level MLP (weights stored transposed: (in, out))
        self.w_l1 = init(k[4], (self.stats_dim, H), self.stats_dim)
        self.b_l1 = init(k[5], (1, H), self.stats_dim)
        self.w_l2 = init(k[6], (H, H), H)
        self.b_l2 = init(k[7], (1, H), H)
        self.w_l3 = init(k[8], (H, output_size), H)
        self.b_l3 = init(k[9], (1, output_size), H)

        # ---- lane-dense padded kernel weights (built once, kept f32) ----
        fp = self.F_PAD
        self.w0_pad = jnp.zeros((F, fp), jnp.float32).at[:, :F].set(self.w_td1[0])
        self.w1_pad = jnp.zeros((F, fp), jnp.float32).at[:, :F].set(self.w_td1[1])
        self.w2_pad = jnp.zeros((F, fp), jnp.float32).at[:, :F].set(self.w_td1[2])
        self.b1_pad = jnp.zeros((1, fp), jnp.float32).at[:, :F].set(self.b_td1)
        self.wc_pad = jnp.zeros((fp, fp), jnp.float32).at[:F, :F].set(self.w_td2)
        self.b2_pad = jnp.zeros((1, fp), jnp.float32).at[:, :F].set(self.b_td2)
        wl1_r = self.w_l1.reshape(self.n_stats, F, H)
        self.wl1_pad = (jnp.zeros((self.n_stats, fp, H), jnp.float32)
                        .at[:, :F, :].set(wl1_r).reshape(self.S_PAD, H))
        self.wl3_pad = jnp.zeros((H, self.OUT_PAD), jnp.float32).at[:, :output_size].set(self.w_l3)
        self.bl3_pad = jnp.zeros((1, self.OUT_PAD), jnp.float32).at[:, :output_size].set(self.b_l3)

    # ---- device-side forward for a pre-padded batch -------------------------------------------
    def forward_padded(self, X, t_lens, t_tile):
        """X: (B, T, F) zero-padded input in self.stream_dtype with T % t_tile == 0;
        t_lens: (B,) int32 valid conv-output rows per item (= n_frames - 2)."""
        B, T_x, F = X.shape
        assert F == self.feature_size and T_x % t_tile == 0 and t_tile % 8 == 0
        n_t = T_x // t_tile
        fp, sp = self.F_PAD, self.S_PAD

        kern = functools.partial(_conv_stats_kernel,
                                 include_mean=self.include_mean,
                                 include_std=self.include_std,
                                 include_max=self.include_max,
                                 t_tile=t_tile)

        flops = int(B * T_x * 2 * (3 * F * fp + fp * fp))
        bytes_acc = int(X.size * X.dtype.itemsize
                        + 4 * (3 * F * fp + fp * fp + 3 * fp + B * sp))

        # TODO(synk): pipeline_mode=pl.Buffered(1) on the constant weight specs would halve their
        # VMEM footprint (mainly useful on v7x for large F); left at default buffering here.
        stats = pl.pallas_call(
            kern,
            out_shape=jax.ShapeDtypeStruct((B, 1, sp), jnp.float32),
            grid_spec=pltpu.PrefetchScalarGridSpec(
                num_scalar_prefetch=1,
                grid=(B, n_t),            # time axis must stay the last grid dim (see kernel note)
                in_specs=[
                    pl.BlockSpec((1, t_tile, F), lambda b, t, lens: (b, t, 0)),
                    pl.BlockSpec((F, fp), lambda b, t, lens: (0, 0)),
                    pl.BlockSpec((F, fp), lambda b, t, lens: (0, 0)),
                    pl.BlockSpec((F, fp), lambda b, t, lens: (0, 0)),
                    pl.BlockSpec((1, fp), lambda b, t, lens: (0, 0)),
                    pl.BlockSpec((fp, fp), lambda b, t, lens: (0, 0)),
                    pl.BlockSpec((1, fp), lambda b, t, lens: (0, 0)),
                ],
                out_specs=pl.BlockSpec((1, 1, sp), lambda b, t, lens: (b, 0, 0)),
                scratch_shapes=[
                    pltpu.VMEM((2, F), jnp.float32),    # conv halo (last 2 rows of previous tile)
                    pltpu.VMEM((1, fp), jnp.float32),   # running sum
                    pltpu.VMEM((1, fp), jnp.float32),   # running sum of squares
                    pltpu.VMEM((1, fp), jnp.float32),   # running max
                ]),
            compiler_params=pltpu.CompilerParams(
                dimension_semantics=("parallel", "arbitrary"),   # batch -> megacore on v7x
                vmem_limit_bytes=_vmem_limit_bytes()),
            cost_estimate=pl.CostEstimate(flops=flops, transcendentals=0,
                                          bytes_accessed=bytes_acc),
        )(t_lens, X, self.w0_pad, self.w1_pad, self.w2_pad, self.b1_pad,
          self.wc_pad, self.b2_pad)

        # Segment-level MLP over the whole batch in one small pallas_call (out of the time loop;
        # the pooled-stats round trip is only B * S_PAD * 4 bytes).
        s2 = stats[:, 0, :]
        B_pad = _round_up(B, 8)
        if B_pad != B:
            s2 = jnp.pad(s2, ((0, B_pad - B), (0, 0)))
        out = pl.pallas_call(
            _mlp_kernel,
            out_shape=jax.ShapeDtypeStruct((B_pad, self.OUT_PAD), jnp.float32),
        )(s2, self.wl1_pad, self.b_l1, self.w_l2, self.b_l2, self.wl3_pad, self.bl3_pad)
        return out[:B, :self.output_size]

    # ---- convenience entry point: list of variable-length (N_i, F) items -----------------------
    def __call__(self, x_list, time_tile=None):
        F = self.feature_size
        B = len(x_list)
        lens = np.array([int(x.shape[0]) for x in x_list], np.int64)
        assert (lens >= 3).all(), "items need at least 3 frames (conv kernel height 3)"
        for x in x_list:
            assert x.shape[1] == F

        tt = int(time_tile) if time_tile is not None else self.time_tile
        tt = max(16, min(tt, _round_up(int(lens.max()), 16)))   # clamp tile to sequence length
        T_x = _round_up(int(lens.max()), tt)

        # single host-side pack + one device transfer (no per-item device ops, no windowed copy)
        Xh = np.zeros((B, T_x, F), np.float32)
        for i, x in enumerate(x_list):
            Xh[i, :lens[i]] = np.asarray(x, np.float32)
        X = jnp.asarray(Xh, dtype=self.stream_dtype)
        t_lens = jnp.asarray(lens - 2, jnp.int32)
        return self.forward_padded(X, t_lens, tt)

    # ---- pure-JAX reference (mirrors the PyTorch module) for validation ------------------------
    def reference(self, x_list):
        outs = []
        for x in x_list:
            t = x.shape[0] - 2
            h1 = (x[0:t] @ self.w_td1[0] + x[1:t + 1] @ self.w_td1[1]
                  + x[2:t + 2] @ self.w_td1[2] + self.b_td1)
            h1 = jnp.maximum(h1, 0.0)
            h2 = h1 @ self.w_td2 + self.b_td2
            parts = []
            if self.include_mean:
                parts.append(jnp.mean(h2, axis=0, keepdims=True))
            if self.include_std:
                m = jnp.mean(h2, axis=0, keepdims=True)
                parts.append(jnp.sqrt(jnp.sum((h2 - m) ** 2, axis=0, keepdims=True) / (t - 1)))
            if self.include_max:
                parts.append(jnp.max(h2, axis=0, keepdims=True))
            outs.append(jnp.concatenate(parts, axis=1))
        s = jnp.concatenate(outs, axis=0)
        h = jnp.maximum(s @ self.w_l1 + self.b_l1, 0.0)
        h = jnp.maximum(h @ self.w_l2 + self.b_l2, 0.0)
        return h @ self.w_l3 + self.b_l3


if __name__ == "__main__":
    feature_size = 8
    output_size = 4
    key = jax.random.PRNGKey(0)
    k1, k2, k3 = jax.random.split(key, 3)
    # list of variable-length (N_frames, feature_size) items (list length plays the batch role)
    x_list = [
        jax.random.normal(k1, (16, feature_size), jnp.float32),
        jax.random.normal(k2, (12, feature_size), jnp.float32),
        jax.random.normal(k3, (20, feature_size), jnp.float32),
    ]

    # f32-streamed model with a tiny time tile: exercises the multi-tile halo carry + length
    # masking path.  (Loose tolerance: TPU matmuls use reduced-precision passes by default.)
    model_f32 = ConvolutionFeatureProcessorPallas(
        feature_size, output_size,
        include_mean=True, include_std=True, include_max=True,
        stream_dtype=jnp.float32)
    ref = model_f32.reference(x_list)
    out_f32 = jax.block_until_ready(model_f32(x_list, time_tile=16))
    assert out_f32.shape == (len(x_list), output_size)
    assert jnp.allclose(out_f32, ref, rtol=2e-2, atol=2e-2), "f32 kernel mismatch vs reference"

    # default bf16-streamed model (same weights: same init key), single large time tile
    model_bf16 = ConvolutionFeatureProcessorPallas(
        feature_size, output_size,
        include_mean=True, include_std=True, include_max=True)
    out_bf16 = jax.block_until_ready(model_bf16(x_list))
    assert out_bf16.shape == (len(x_list), output_size)
    assert jnp.allclose(out_bf16, ref, rtol=6e-2, atol=6e-2), "bf16 kernel mismatch vs reference"

    print("KERNEL_OK")
</pallas_src>

<mosaic_0001>
module attributes {stable_mosaic.version = 11 : i64} {
  func.func @_conv_stats_kernel(%arg0: i32, %arg1: i32, %arg2: memref<3xi32, #tpu.memory_space<smem>>, %arg3: memref<1x16x8xf32, #tpu.memory_space<vmem>>, %arg4: memref<8x128xf32, #tpu.memory_space<vmem>>, %arg5: memref<8x128xf32, #tpu.memory_space<vmem>>, %arg6: memref<8x128xf32, #tpu.memory_space<vmem>>, %arg7: memref<1x128xf32, #tpu.memory_space<vmem>>, %arg8: memref<128x128xf32, #tpu.memory_space<vmem>>, %arg9: memref<1x128xf32, #tpu.memory_space<vmem>>, %arg10: memref<1x1x384xf32, #tpu.memory_space<vmem>>, %arg11: memref<2x8xf32, #tpu.memory_space<vmem>>, %arg12: memref<1x128xf32, #tpu.memory_space<vmem>>, %arg13: memref<1x128xf32, #tpu.memory_space<vmem>>, %arg14: memref<1x128xf32, #tpu.memory_space<vmem>>) attributes {dimension_semantics = [#tpu.dimension_semantics<parallel>, #tpu.dimension_semantics<arbitrary>], iteration_bounds = array<i64: 3, 2>, scalar_prefetch = 1 : i64, scratch_operands = 4 : i64, tpu.core_type = #tpu.core_type<tc>, window_params = [{transform_indices = @transform_0, window_bounds = array<i64: 1, 16, 8>}, {pipeline_mode = #tpu.pipeline_mode<synchronous>, transform_indices = @transform_1, window_bounds = array<i64: 8, 128>}, {pipeline_mode = #tpu.pipeline_mode<synchronous>, transform_indices = @transform_2, window_bounds = array<i64: 8, 128>}, {pipeline_mode = #tpu.pipeline_mode<synchronous>, transform_indices = @transform_3, window_bounds = array<i64: 8, 128>}, {pipeline_mode = #tpu.pipeline_mode<synchronous>, transform_indices = @transform_4, window_bounds = array<i64: 1, 128>}, {pipeline_mode = #tpu.pipeline_mode<synchronous>, transform_indices = @transform_5, window_bounds = array<i64: 128, 128>}, {pipeline_mode = #tpu.pipeline_mode<synchronous>, transform_indices = @transform_6, window_bounds = array<i64: 1, 128>}, {transform_indices = @transform_7, window_bounds = array<i64: 1, 1, 384>}]} {
    %c0_i32 = arith.constant 0 : i32
    %0 = arith.cmpi eq, %arg1, %c0_i32 : i32
    %1 = arith.extui %0 : i1 to i32
    %c0_i32_0 = arith.constant 0 : i32
    %2 = arith.cmpi ne, %1, %c0_i32_0 : i32
    scf.if %2 {
      %cst_42 = arith.constant 0.000000e+00 : f32
      %69 = vector.broadcast %cst_42 : f32 to vector<2x8xf32>
      %c0_43 = arith.constant 0 : index
      %c0_44 = arith.constant 0 : index
      %70 = vector.load %arg11[%c0_43, %c0_44] : memref<2x8xf32, #tpu.memory_space<vmem>>, vector<2x8xf32>
      tpu.vector_store %arg11[%c0_43, %c0_44], %69 {strides = array<i32>} : memref<2x8xf32, #tpu.memory_space<vmem>>, vector<2x8xf32>,
      %cst_45 = arith.constant 0.000000e+00 : f32
      %71 = vector.broadcast %cst_45 : f32 to vector<1x128xf32>
      %c0_46 = arith.constant 0 : index
      %c0_47 = arith.constant 0 : index
      %72 = vector.load %arg12[%c0_46, %c0_47] : memref<1x128xf32, #tpu.memory_space<vmem>>, vector<1x128xf32>
      tpu.vector_store %arg12[%c0_46, %c0_47], %71 {strides = array<i32>} : memref<1x128xf32, #tpu.memory_space<vmem>>, vector<1x128xf32>,
      %cst_48 = arith.constant 0.000000e+00 : f32
      %73 = vector.broadcast %cst_48 : f32 to vector<1x128xf32>
      %c0_49 = arith.constant 0 : index
      %c0_50 = arith.constant 0 : index
      %74 = vector.load %arg13[%c0_49, %c0_50] : memref<1x128xf32, #tpu.memory_space<vmem>>, vector<1x128xf32>
      tpu.vector_store %arg13[%c0_49, %c0_50], %73 {strides = array<i32>} : memref<1x128xf32, #tpu.memory_space<vmem>>, vector<1x128xf32>,
      %cst_51 = arith.constant 0xFF800000 : f32
      %75 = vector.broadcast %cst_51 : f32 to vector<1x128xf32>
      %c0_52 = arith.constant 0 : index
      %c0_53 = arith.constant 0 : index
      %76 = vector.load %arg14[%c0_52, %c0_53] : memref<1x128xf32, #tpu.memory_space<vmem>>, vector<1x128xf32>
      tpu.vector_store %arg14[%c0_52, %c0_53], %75 {strides = array<i32>} : memref<1x128xf32, #tpu.memory_space<vmem>>, vector<1x128xf32>,
    } else {
    }
    %c0 = arith.constant 0 : index
    %c0_1 = arith.constant 0 : index
    %c0_2 = arith.constant 0 : index
    %3 = vector.load %arg3[%c0, %c0_1, %c0_2] : memref<1x16x8xf32, #tpu.memory_space<vmem>>, vector<1x16x8xf32>
    %4 = vector.shape_cast %3 : vector<1x16x8xf32> to vector<16x8xf32>
    %c0_3 = arith.constant 0 : index
    %c0_4 = arith.constant 0 : index
    %5 = vector.load %arg11[%c0_3, %c0_4] : memref<2x8xf32, #tpu.memory_space<vmem>>, vector<2x8xf32>
    %6 = tpu.concatenate %5, %4 in 0 : vector<2x8xf32>, vector<16x8xf32> -> vector<18x8xf32>
    %7 = vector.extract_strided_slice %6 {offsets = [0, 0], sizes = [16, 8], strides = [1, 1]} : vector<18x8xf32> to vector<16x8xf32>
    %c0_5 = arith.constant 0 : index
    %c0_6 = arith.constant 0 : index
    %8 = vector.load %arg4[%c0_5, %c0_6] : memref<8x128xf32, #tpu.memory_space<vmem>>, vector<8x128xf32>
    %cst = arith.constant dense<0.000000e+00> : vector<16x128xf32>
    %9 = tpu.matmul %7, %8, %cst {dimension_numbers = #tpu.dot_dimension_numbers<[1], [0], [0], [1], [0, 0, 1, 1], [], []>} : vector<16x8xf32>, vector<8x128xf32>, vector<16x128xf32> -> vector<16x128xf32>
    %10 = vector.extract_strided_slice %6 {offsets = [1, 0], sizes = [16, 8], strides = [1, 1]} : vector<18x8xf32> to vector<16x8xf32>
    %c0_7 = arith.constant 0 : index
    %c0_8 = arith.constant 0 : index
    %11 = vector.load %arg5[%c0_7, %c0_8] : memref<8x128xf32, #tpu.memory_space<vmem>>, vector<8x128xf32>
    %cst_9 = arith.constant dense<0.000000e+00> : vector<16x128xf32>
    %12 = tpu.matmul %10, %11, %cst_9 {dimension_numbers = #tpu.dot_dimension_numbers<[1], [0], [0], [1], [0, 0, 1, 1], [], []>} : vector<16x8xf32>, vector<8x128xf32>, vector<16x128xf32> -> vector<16x128xf32>
    %13 = arith.addf %9, %12 : vector<16x128xf32>
    %14 = vector.extract_strided_slice %6 {offsets = [2, 0], sizes = [16, 8], strides = [1, 1]} : vector<18x8xf32> to vector<16x8xf32>
    %c0_10 = arith.constant 0 : index
    %c0_11 = arith.constant 0 : index
    %15 = vector.load %arg6[%c0_10, %c0_11] : memref<8x128xf32, #tpu.memory_space<vmem>>, vector<8x128xf32>
    %cst_12 = arith.constant dense<0.000000e+00> : vector<16x128xf32>
    %16 = tpu.matmul %14, %15, %cst_12 {dimension_numbers = #tpu.dot_dimension_numbers<[1], [0], [0], [1], [0, 0, 1, 1], [], []>} : vector<16x8xf32>, vector<8x128xf32>, vector<16x128xf32> -> vector<16x128xf32>
    %17 = arith.addf %13, %16 : vector<16x128xf32>
    %c0_13 = arith.constant 0 : index
    %c0_14 = arith.constant 0 : index
    %18 = vector.load %arg7[%c0_13, %c0_14] : memref<1x128xf32, #tpu.memory_space<vmem>>, vector<1x128xf32>
    %19 = vector.broadcast %18 : vector<1x128xf32> to vector<16x128xf32>
    %20 = arith.addf %17, %19 : vector<16x128xf32>
    %cst_15 = arith.constant 0.000000e+00 : f32
    %21 = vector.broadcast %cst_15 : f32 to vector<16x128xf32>
    %22 = arith.maximumf %20, %21 : vector<16x128xf32>
    %c0_16 = arith.constant 0 : index
    %c0_17 = arith.constant 0 : index
    %23 = vector.load %arg8[%c0_16, %c0_17] : memref<128x128xf32, #tpu.memory_space<vmem>>, vector<128x128xf32>
    %cst_18 = arith.constant dense<0.000000e+00> : vector<16x128xf32>
    %24 = tpu.matmul %22, %23, %cst_18 {dimension_numbers = #tpu.dot_dimension_numbers<[1], [0], [0], [1], [0, 0, 1, 1], [], []>} : vector<16x128xf32>, vector<128x128xf32>, vector<16x128xf32> -> vector<16x128xf32>
    %c0_19 = arith.constant 0 : index
    %c0_20 = arith.constant 0 : index
    %25 = vector.load %arg9[%c0_19, %c0_20] : memref<1x128xf32, #tpu.memory_space<vmem>>, vector<1x128xf32>
    %26 = vector.broadcast %25 : vector<1x128xf32> to vector<16x128xf32>
    %27 = arith.addf %24, %26 : vector<16x128xf32>
    %28 = vector.extract_strided_slice %4 {offsets = [14, 0], sizes = [2, 8], strides = [1, 1]} : vector<16x8xf32> to vector<2x8xf32>
    %c0_21 = arith.constant 0 : index
    %c0_22 = arith.constant 0 : index
    %29 = vector.load %arg11[%c0_21, %c0_22] : memref<2x8xf32, #tpu.memory_space<vmem>>, vector<2x8xf32>
    tpu.vector_store %arg11[%c0_21, %c0_22], %28 {strides = array<i32>} : memref<2x8xf32, #tpu.memory_space<vmem>>, vector<2x8xf32>,
    %30 = arith.index_cast %arg0 : i32 to index
    %31 = memref.load %arg2[%30] : memref<3xi32, #tpu.memory_space<smem>>
    %32 = tpu.iota {dimensions = array<i32: 0>} : vector<16x1xi32>
    %c16_i32 = arith.constant 16 : i32
    %33 = arith.muli %arg1, %c16_i32 : i32
    %c2_i32 = arith.constant 2 : i32
    %34 = arith.subi %33, %c2_i32 : i32
    %35 = vector.broadcast %34 : i32 to vector<16x1xi32>
    %36 = arith.addi %32, %35 : vector<16x1xi32>
    %c0_i32_23 = arith.constant 0 : i32
    %37 = vector.broadcast %c0_i32_23 : i32 to vector<16x1xi32>
    %38 = arith.cmpi sge, %36, %37 : vector<16x1xi32>
    %39 = vector.broadcast %31 : i32 to vector<16x1xi32>
    %40 = arith.cmpi slt, %36, %39 : vector<16x1xi32>
    %41 = arith.andi %38, %40 : vector<16x1xi1>
    %cst_24 = arith.constant 0.000000e+00 : f32
    %42 = vector.shape_cast %41 : vector<16x1xi1> to vector<16x1xi1>
    %43 = vector.broadcast %42 : vector<16x1xi1> to vector<16x128xi1>
    %44 = vector.broadcast %cst_24 : f32 to vector<16x128xf32>
    %45 = arith.select %43, %27, %44 : vector<16x128xi1>, vector<16x128xf32>
    %c0_25 = arith.constant 0 : index
    %c0_26 = arith.constant 0 : index
    %46 = vector.load %arg12[%c0_25, %c0_26] : memref<1x128xf32, #tpu.memory_space<vmem>>, vector<1x128xf32>
    %cst_27 = arith.constant dense<0.000000e+00> : vector<128xf32>
    %47 = vector.multi_reduction <add>, %45, %cst_27 [0] : vector<16x128xf32> to vector<128xf32>
    %48 = vector.shape_cast %47 : vector<128xf32> to vector<1x128xf32>
    %49 = arith.addf %46, %48 : vector<1x128xf32>
    %c0_28 = arith.constant 0 : index
    %c0_29 = arith.constant 0 : index
    %50 = vector.load %arg12[%c0_28, %c0_29] : memref<1x128xf32, #tpu.memory_space<vmem>>, vector<1x128xf32>
    tpu.vector_store %arg12[%c0_28, %c0_29], %49 {strides = array<i32>} : memref<1x128xf32, #tpu.memory_space<vmem>>, vector<1x128xf32>,
    %c0_30 = arith.constant 0 : index
    %c0_31 = arith.constant 0 : index
    %51 = vector.load %arg13[%c0_30, %c0_31] : memref<1x128xf32, #tpu.memory_space<vmem>>, vector<1x128xf32>
    %52 = arith.mulf %45, %45 : vector<16x128xf32>
    %cst_32 = arith.constant dense<0.000000e+00> : vector<128xf32>
    %53 = vector.multi_reduction <add>, %52, %cst_32 [0] : vector<16x128xf32> to vector<128xf32>
    %54 = vector.shape_cast %53 : vector<128xf32> to vector<1x128xf32>
    %55 = arith.addf %51, %54 : vector<1x128xf32>
    %c0_33 = arith.constant 0 : index
    %c0_34 = arith.constant 0 : index
    %56 = vector.load %arg13[%c0_33, %c0_34] : memref<1x128xf32, #tpu.memory_space<vmem>>, vector<1x128xf32>
    tpu.vector_store %arg13[%c0_33, %c0_34], %55 {strides = array<i32>} : memref<1x128xf32, #tpu.memory_space<vmem>>, vector<1x128xf32>,
    %c0_35 = arith.constant 0 : index
    %c0_36 = arith.constant 0 : index
    %57 = vector.load %arg14[%c0_35, %c0_36] : memref<1x128xf32, #tpu.memory_space<vmem>>, vector<1x128xf32>
    %cst_37 = arith.constant 0xFF800000 : f32
    %58 = vector.shape_cast %41 : vector<16x1xi1> to vector<16x1xi1>
    %59 = vector.broadcast %58 : vector<16x1xi1> to vector<16x128xi1>
    %60 = vector.broadcast %cst_37 : f32 to vector<16x128xf32>
    %61 = arith.select %59, %27, %60 : vector<16x128xi1>, vector<16x128xf32>
    %cst_38 = arith.constant dense<0xFF800000> : vector<128xf32>
    %62 = vector.multi_reduction <maximumf>, %61, %cst_38 [0] : vector<16x128xf32> to vector<128xf32>
    %63 = vector.shape_cast %62 : vector<128xf32> to vector<1x128xf32>
    %64 = arith.maximumf %57, %63 : vector<1x128xf32>
    %c0_39 = arith.constant 0 : index
    %c0_40 = arith.constant 0 : index
    %65 = vector.load %arg14[%c0_39, %c0_40] : memref<1x128xf32, #tpu.memory_space<vmem>>, vector<1x128xf32>
    tpu.vector_store %arg14[%c0_39, %c0_40], %64 {strides = array<i32>} : memref<1x128xf32, #tpu.memory_space<vmem>>, vector<1x128xf32>,
    %c1_i32 = arith.constant 1 : i32
    %66 = arith.cmpi eq, %arg1, %c1_i32 : i32
    %67 = arith.extui %66 : i1 to i32
    %c0_i32_41 = arith.constant 0 : i32
    %68 = arith.cmpi ne, %67, %c0_i32_41 : i32
    scf.if %68 {
      %69 = arith.sitofp %31 : i32 to f32
      %c0_42 = arith.constant 0 : index
      %c0_43 = arith.constant 0 : index
      %70 = vector.load %arg12[%c0_42, %c0_43] : memref<1x128xf32, #tpu.memory_space<vmem>>, vector<1x128xf32>
      %71 = vector.broadcast %69 : f32 to vector<1x128xf32>
      %72 = arith.divf %70, %71 : vector<1x128xf32>
      %cst_44 = arith.constant 1.000000e+00 : f32
      %73 = arith.subf %69, %cst_44 : f32
      %cst_45 = arith.constant 1.000000e+00 : f32
      %74 = arith.maximumf %73, %cst_45 : f32
      %c0_46 = arith.constant 0 : index
      %c0_47 = arith.constant 0 : index
      %75 = vector.load %arg13[%c0_46, %c0_47] : memref<1x128xf32, #tpu.memory_space<vmem>>, vector<1x128xf32>
      %c0_48 = arith.constant 0 : index
      %c0_49 = arith.constant 0 : index
      %76 = vector.load %arg12[%c0_48, %c0_49] : memref<1x128xf32, #tpu.memory_space<vmem>>, vector<1x128xf32>
      %77 = arith.mulf %76, %72 : vector<1x128xf32>
      %78 = arith.subf %75, %77 : vector<1x128xf32>
      %79 = vector.broadcast %74 : f32 to vector<1x128xf32>
      %80 = arith.divf %78, %79 : vector<1x128xf32>
      %cst_50 = arith.constant 0.000000e+00 : f32
      %81 = vector.broadcast %cst_50 : f32 to vector<1x128xf32>
      %82 = arith.maximumf %80, %81 : vector<1x128xf32>
      %83 = math.sqrt %82 : vector<1x128xf32>
      %c0_51 = arith.constant 0 : index
      %c0_52 = arith.constant 0 : index
      %84 = vector.load %arg14[%c0_51, %c0_52] : memref<1x128xf32, #tpu.memory_space<vmem>>, vector<1x128xf32>
      %85 = tpu.concatenate %72, %83, %84 in 1 : vector<1x128xf32>, vector<1x128xf32>, vector<1x128xf32> -> vector<1x384xf32>
      %c0_53 = arith.constant 0 : index
      %c0_54 = arith.constant 0 : index
      %c0_55 = arith.constant 0 : index
      %86 = vector.load %arg10[%c0_53, %c0_54, %c0_55] : memref<1x1x384xf32, #tpu.memory_space<vmem>>, vector<1x1x384xf32>
      %87 = vector.shape_cast %86 : vector<1x1x384xf32> to vector<1x384xf32>
      %88 = vector.shape_cast %85 : vector<1x384xf32> to vector<1x1x384xf32>
      tpu.vector_store %arg10[%c0_53, %c0_54, %c0_55], %88 {strides = array<i32>} : memref<1x1x384xf32, #tpu.memory_space<vmem>>, vector<1x1x384xf32>,
    } else {
    }
    return
  }
  func.func @transform_0(%arg0: i32, %arg1: i32, %arg2: memref<3xi32, #tpu.memory_space<smem>>) -> (i32, i32, i32) {
    %c0_i32 = arith.constant 0 : i32
    %c0_i32_0 = arith.constant 0 : i32
    return %arg0, %arg1, %c0_i32 : i32, i32, i32
  }
  func.func @transform_1(%arg0: i32, %arg1: i32, %arg2: memref<3xi32, #tpu.memory_space<smem>>) -> (i32, i32) {
    %c0_i32 = arith.constant 0 : i32
    %c0_i32_0 = arith.constant 0 : i32
    %c0_i32_1 = arith.constant 0 : i32
    return %c0_i32, %c0_i32_0 : i32, i32
  }
  func.func @transform_2(%arg0: i32, %arg1: i32, %arg2: memref<3xi32, #tpu.memory_space<smem>>) -> (i32, i32) {
    %c0_i32 = arith.constant 0 : i32
    %c0_i32_0 = arith.constant 0 : i32
    %c0_i32_1 = arith.constant 0 : i32
    return %c0_i32, %c0_i32_0 : i32, i32
  }
  func.func @transform_3(%arg0: i32, %arg1: i32, %arg2: memref<3xi32, #tpu.memory_space<smem>>) -> (i32, i32) {
    %c0_i32 = arith.constant 0 : i32
    %c0_i32_0 = arith.constant 0 : i32
    %c0_i32_1 = arith.constant 0 : i32
    return %c0_i32, %c0_i32_0 : i32, i32
  }
  func.func @transform_4(%arg0: i32, %arg1: i32, %arg2: memref<3xi32, #tpu.memory_space<smem>>) -> (i32, i32) {
    %c0_i32 = arith.constant 0 : i32
    %c0_i32_0 = arith.constant 0 : i32
    %c0_i32_1 = arith.constant 0 : i32
    return %c0_i32, %c0_i32_0 : i32, i32
  }
  func.func @transform_5(%arg0: i32, %arg1: i32, %arg2: memref<3xi32, #tpu.memory_space<smem>>) -> (i32, i32) {
    %c0_i32 = arith.constant 0 : i32
    %c0_i32_0 = arith.constant 0 : i32
    %c0_i32_1 = arith.constant 0 : i32
    return %c0_i32, %c0_i32_0 : i32, i32
  }
  func.func @transform_6(%arg0: i32, %arg1: i32, %arg2: memref<3xi32, #tpu.memory_space<smem>>) -> (i32, i32) {
    %c0_i32 = arith.constant 0 : i32
    %c0_i32_0 = arith.constant 0 : i32
    %c0_i32_1 = arith.constant 0 : i32
    return %c0_i32, %c0_i32_0 : i32, i32
  }
  func.func @transform_7(%arg0: i32, %arg1: i32, %arg2: memref<3xi32, #tpu.memory_space<smem>>) -> (i32, i32, i32) {
    %c0_i32 = arith.constant 0 : i32
    %c0_i32_0 = arith.constant 0 : i32
    %c0_i32_1 = arith.constant 0 : i32
    return %arg0, %c0_i32, %c0_i32_0 : i32, i32, i32
  }
}

</mosaic_0001>

<llo_original>
// kernel: tpu_custom_call.1
$region0: #{tpu_custom_call.1}
  #allocation0 [shape = 'u32[]', space=smem, size = 0x4, offset = 0x4, fixed_abs, tag = 'smem constant byte address 0x4 - core index']
  #allocation1 [shape = 'u32[72,128]{1,0:T(1,128)}', space=vmem, size = 0x9000, scoped, tag = 'internal scratch']
  #allocation2 [shape = 'f32[2,8]{1,0:T(2,128)}', space=vmem, size = 0x400, scoped, tag = 'scratch operand']
  #allocation3 [shape = 'f32[1,128]{1,0:T(1,128)}', space=vmem, size = 0x200, scoped, tag = 'scratch operand']
  #allocation4 [shape = 'f32[1,128]{1,0:T(1,128)}', space=vmem, size = 0x200, scoped, tag = 'scratch operand']
  #allocation5 [shape = 'f32[1,128]{1,0:T(1,128)}', space=vmem, size = 0x200, scoped, tag = 'scratch operand']
  #allocation6 [shape = 's32[1]{0}', space=sflag, size = 0x4, scoped, tag = 'scoped memory for tpu_custom_call.1']
  #allocation7 [shape = 'u8[512]{0}', space=smem, size = 0x200, scoped, tag = 'prefetched SMEM operand 0']
  %s0 = inlined_call_operand.vmem [shape: s32[3], index: 0, kind: input, shape index: {}]
  %s1 = inlined_call_operand.vmem [shape: f32[3,32,8], index: 1, kind: input, shape index: {}]
  %s2 = inlined_call_operand.vmem [shape: f32[8,128], index: 2, kind: input, shape index: {}]
  %s3 = inlined_call_operand.vmem [shape: f32[8,128], index: 3, kind: input, shape index: {}]
  %s4 = inlined_call_operand.vmem [shape: f32[8,128], index: 4, kind: input, shape index: {}]
  %s5 = inlined_call_operand.vmem [shape: f32[1,128], index: 5, kind: input, shape index: {}]
  %s6 = inlined_call_operand.hbm [shape: f32[128,128], index: 6, kind: input, shape index: {}]
  %s7 = inlined_call_operand.vmem [shape: f32[1,128], index: 7, kind: input, shape index: {}]
  %s8 = inlined_call_operand.hbm [shape: f32[3,1,384], index: 8, kind: output, shape index: {}]
  %s9 = sld [smem:[#allocation0]]
  $region73: #{tpu_custom_call.1} parent=0
    _
  %s11 = ssub.s32 1, %s9
  %s12 = scalar_select 0, %s11, %s9
  %s14 = sshll.u32 %s0, 4
  %s15 = int_to_ptr.vmem [resolvable:$true] %s14
  %17 = dma.vmem_to_smem %s15, 16, [#allocation7], [#allocation6]
  %19 = dma.done [#allocation6], 16
  %20 = sfence
  $region1: #{tpu_custom_call.1} parent=0
    #allocation8 [shape = 'u8[65536]{0}', space=vmem, size = 0x10000, scoped, tag = 'input window, operand 6, single buffered']
    #allocation9 [shape = 's32[2]{0}', space=sflag, size = 0x8, scoped, tag = 'scoped memory for tpu_custom_call.1']
    #allocation10 [shape = 's32[2]{0}', space=sflag, size = 0x8, scoped, tag = 'scoped memory for tpu_custom_call.1']
    #allocation11 [shape = 'u8[3072]{0}', space=vmem, size = 0xc00, scoped, tag = 'output window, operand 0']
    %21 = vsyncpa [#allocation9], 0
    %22 = vsyncpa [#allocation10], 0
    %s23 = scalar_lea.sflag [#allocation10], 1
    %24 = vsyncpa %s23, 0
    loop: start=0, step=1, limit=8
    $region2: #{tpu_custom_call.1} parent=1 // loop_pre_header
      _
    $region3: #{tpu_custom_call.1} parent=1 // loop_header
      %s26 = sphi 0, %s30
      %p27 = scmp.ge.s32.totalorder %s26, 8
      %s33 = sphi 0, %s45
      %s34 = sphi 0, %s41
      %s35 = sphi 0, %s33
      %s36 = sphi 0, %s34
      %s37 = sphi 0, %s35
      %s38 = sphi 0, %s36
      %s50 = sphi 0, %s52
      %s53 = sphi 0, %s50
      %s54 = sphi 0, %s53
      %s70 = sphi 0, %s54
      %s74 = sphi 0, %s74
      %s76 = sphi 0, %s74
      %s77 = sphi 0, %s76
      %s91 = sphi 0, %s77
      %s95 = sphi 0, %s95
      %s97 = sphi 0, %s95
      %s98 = sphi 0, %s97
      %s112 = sphi 0, %s98
      %s116 = sphi 0, %s116
      %s118 = sphi 0, %s116
      %s119 = sphi 0, %s118
      %s133 = sphi 0, %s119
      %s137 = sphi 0, %s137
      %s139 = sphi 0, %s137
      %s140 = sphi 0, %s139
      %s154 = sphi 0, %s140
      %s158 = sphi 0, %s158
      %s160 = sphi 0, %s158
      %s161 = sphi 0, %s160
      %s175 = sphi 0, %s161
      %s179 = sphi 0, %s179
      %s181 = sphi 0, %s179
      %s182 = sphi 0, %s181
      %s196 = sphi 0, %s182
      %s202 = sphi 0, %s204
      %s205 = sphi 0, %s202
      %s206 = sphi 0, %s205
      %s222 = sphi 0, %s206
    $region4: #{tpu_custom_call.1} parent=1 // loop_header_branch
      %29 = sbr.rel (%p27) target = $region8
    $region5: #{tpu_custom_call.1} parent=1 // loop_body
      %s31 = ssub.s32 %s26, 1
      %s32 = ssub.s32 %s26, 2
      %s39 = sadd.s32 1, %s34
      %p40 = scmp.ge.s32.totalorder %s39, 2
      %s41 = scalar_select %p40, 0, %s39
      %s42 = sadd.s32 1, %s33
      %s43 = scalar_select %p40, %s42, %s33
      %p44 = scmp.ge.s32.totalorder %s43, 3
      %s45 = scalar_select %p44, 0, %s43
      %s46 = ssub.s32 %s33, %s45
      %s47 = ssub.s32 %s34, %s41
      %s48 = sor.u32 %s46, %s47
      %p49 = scmp.eq.s32.totalorder %s48, 0
      %s51 = sadd.s32 %s50, 1
      %s52 = scalar_select %p49, %s50, %s51
      %p55 = pneg %p49
      %p56 = scmp.eq.s32.totalorder %s26, 5
      %p57 = por %p55, %p56
      %p58 = scmp.ne.s32.totalorder %s50, %s53
      %p59 = scmp.eq.s32.totalorder %s26, 0
      %p60 = por %p58, %p59
      %p61 = scmp.ne.s32.totalorder %s50, %s53
      %p62 = scmp.eq.s32.totalorder %s31, 5
      %p63 = por %p61, %p62
      %p64 = scmp.ne.s32.totalorder %s53, %s54
      %p65 = scmp.eq.s32.totalorder %s31, 0
      %p66 = por %p64, %p65
      %p67 = scmp.ne.s32.totalorder %s53, %s54
      %p68 = scmp.eq.s32.totalorder %s32, 5
      %p69 = por %p67, %p68
      %p71 = scmp.ne.s32.totalorder %s54, %s70
      %p72 = scmp.eq.s32.totalorder %s32, 0
      %p73 = por %p71, %p72
      %s75 = sadd.s32 %s74, 1
      %p78 = scmp.eq.s32.totalorder %s26, 5
      %p79 = scmp.ne.s32.totalorder %s74, %s76
      %p80 = scmp.eq.s32.totalorder %s26, 0
      %p81 = por %p79, %p80
      %p82 = scmp.ne.s32.totalorder %s74, %s76
      %p83 = scmp.eq.s32.totalorder %s31, 5
      %p84 = por %p82, %p83
      %p85 = scmp.ne.s32.totalorder %s76, %s77
      %p86 = scmp.eq.s32.totalorder %s31, 0
      %p87 = por %p85, %p86
      %p88 = scmp.ne.s32.totalorder %s76, %s77
      %p89 = scmp.eq.s32.totalorder %s32, 5
      %p90 = por %p88, %p89
      %p92 = scmp.ne.s32.totalorder %s77, %s91
      %p93 = scmp.eq.s32.totalorder %s32, 0
      %p94 = por %p92, %p93
      %s96 = sadd.s32 %s95, 1
      %p99 = scmp.eq.s32.totalorder %s26, 5
      %p100 = scmp.ne.s32.totalorder %s95, %s97
      %p101 = scmp.eq.s32.totalorder %s26, 0
      %p102 = por %p100, %p101
      %p103 = scmp.ne.s32.totalorder %s95, %s97
      %p104 = scmp.eq.s32.totalorder %s31, 5
      %p105 = por %p103, %p104
      %p106 = scmp.ne.s32.totalorder %s97, %s98
      %p107 = scmp.eq.s32.totalorder %s31, 0
      %p108 = por %p106, %p107
      %p109 = scmp.ne.s32.totalorder %s97, %s98
      %p110 = scmp.eq.s32.totalorder %s32, 5
      %p111 = por %p109, %p110
      %p113 = scmp.ne.s32.totalorder %s98, %s112
      %p114 = scmp.eq.s32.totalorder %s32, 0
      %p115 = por %p113, %p114
      %s117 = sadd.s32 %s116, 1
      %p120 = scmp.eq.s32.totalorder %s26, 5
      %p121 = scmp.ne.s32.totalorder %s116, %s118
      %p122 = scmp.eq.s32.totalorder %s26, 0
      %p123 = por %p121, %p122
      %p124 = scmp.ne.s32.totalorder %s116, %s118
      %p125 = scmp.eq.s32.totalorder %s31, 5
      %p126 = por %p124, %p125
      %p127 = scmp.ne.s32.totalorder %s118, %s119
      %p128 = scmp.eq.s32.totalorder %s31, 0
      %p129 = por %p127, %p128
      %p130 = scmp.ne.s32.totalorder %s118, %s119
      %p131 = scmp.eq.s32.totalorder %s32, 5
      %p132 = por %p130, %p131
      %p134 = scmp.ne.s32.totalorder %s119, %s133
      %p135 = scmp.eq.s32.totalorder %s32, 0
      %p136 = por %p134, %p135
      %s138 = sadd.s32 %s137, 1
      %p141 = scmp.eq.s32.totalorder %s26, 5
      %p142 = scmp.ne.s32.totalorder %s137, %s139
      %p143 = scmp.eq.s32.totalorder %s26, 0
      %p144 = por %p142, %p143
      %p145 = scmp.ne.s32.totalorder %s137, %s139
      %p146 = scmp.eq.s32.totalorder %s31, 5
      %p147 = por %p145, %p146
      %p148 = scmp.ne.s32.totalorder %s139, %s140
      %p149 = scmp.eq.s32.totalorder %s31, 0
      %p150 = por %p148, %p149
      %p151 = scmp.ne.s32.totalorder %s139, %s140
      %p152 = scmp.eq.s32.totalorder %s32, 5
      %p153 = por %p151, %p152
      %p155 = scmp.ne.s32.totalorder %s140, %s154
      %p156 = scmp.eq.s32.totalorder %s32, 0
      %p157 = por %p155, %p156
      %s159 = sadd.s32 %s158, 1
      %p162 = scmp.eq.s32.totalorder %s26, 5
      %p163 = scmp.ne.s32.totalorder %s158, %s160
      %p164 = scmp.eq.s32.totalorder %s26, 0
      %p165 = por %p163, %p164
      %p166 = scmp.ne.s32.totalorder %s158, %s160
      %p167 = scmp.eq.s32.totalorder %s31, 5
      %p168 = por %p166, %p167
      %p169 = scmp.ne.s32.totalorder %s160, %s161
      %p170 = scmp.eq.s32.totalorder %s31, 0
      %p171 = por %p169, %p170
      %p172 = scmp.ne.s32.totalorder %s160, %s161
      %p173 = scmp.eq.s32.totalorder %s32, 5
      %p174 = por %p172, %p173
      %p176 = scmp.ne.s32.totalorder %s161, %s175
      %p177 = scmp.eq.s32.totalorder %s32, 0
      %p178 = por %p176, %p177
      %s180 = sadd.s32 %s179, 1
      %p183 = scmp.eq.s32.totalorder %s26, 5
      %p184 = scmp.ne.s32.totalorder %s179, %s181
      %p185 = scmp.eq.s32.totalorder %s26, 0
      %p186 = por %p184, %p185
      %p187 = scmp.ne.s32.totalorder %s179, %s181
      %p188 = scmp.eq.s32.totalorder %s31, 5
      %p189 = por %p187, %p188
      %p190 = scmp.ne.s32.totalorder %s181, %s182
      %p191 = scmp.eq.s32.totalorder %s31, 0
      %p192 = por %p190, %p191
      %p193 = scmp.ne.s32.totalorder %s181, %s182
      %p194 = scmp.eq.s32.totalorder %s32, 5
      %p195 = por %p193, %p194
      %p197 = scmp.ne.s32.totalorder %s182, %s196
      %p198 = scmp.eq.s32.totalorder %s32, 0
      %p199 = por %p197, %p198
      %s200 = ssub.s32 %s33, %s45
      %p201 = scmp.eq.s32.totalorder %s200, 0
      %s203 = sadd.s32 %s202, 1
      %s204 = scalar_select %p201, %s202, %s203
      %p207 = pneg %p201
      %p208 = scmp.eq.s32.totalorder %s26, 5
      %p209 = por %p207, %p208
      %p210 = scmp.ne.s32.totalorder %s202, %s205
      %p211 = scmp.eq.s32.totalorder %s26, 0
      %p212 = por %p210, %p211
      %p213 = scmp.ne.s32.totalorder %s202, %s205
      %p214 = scmp.eq.s32.totalorder %s31, 5
      %p215 = por %p213, %p214
      %p216 = scmp.ne.s32.totalorder %s205, %s206
      %p217 = scmp.eq.s32.totalorder %s31, 0
      %p218 = por %p216, %p217
      %p219 = scmp.ne.s32.totalorder %s205, %s206
      %p220 = scmp.eq.s32.totalorder %s32, 5
      %p221 = por %p219, %p220
      %p223 = scmp.ne.s32.totalorder %s206, %s222
      %p224 = scmp.eq.s32.totalorder %s32, 0
      %p225 = por %p223, %p224
      %p226 = scmp.le.s32.totalorder 1, %s26
      %p227 = scmp.lt.s32.totalorder %s26, 7
      %p228 = pnand %p226, %p227
      %p229 = pneg %p228
      // Predicated region
      $region9: #{tpu_custom_call.1} parent=5 // pred_check
        _
      $region10: #{tpu_custom_call.1} parent=5 // pred_check_branch
        %231 = sbr.rel (%p228) target = $region12
      $region11: #{tpu_custom_call.1} parent=5 // pred_region
        %s232 = ssub.s32 %s26, 1
        // Predicated region
        $region13: #{tpu_custom_call.1} parent=11 // pred_check
          %p233 = pneg %p87
        $region14: #{tpu_custom_call.1} parent=11 // pred_check_branch
          %235 = sbr.rel (%p233) target = $region16
        $region15: #{tpu_custom_call.1} parent=11 // pred_region
          _
        $region16: #{tpu_custom_call.1} parent=11 // pred_fallthru
          _
        // Predicated region
        $region17: #{tpu_custom_call.1} parent=11 // pred_check
          %p236 = pneg %p108
        $region18: #{tpu_custom_call.1} parent=11 // pred_check_branch
          %238 = sbr.rel (%p236) target = $region20
        $region19: #{tpu_custom_call.1} parent=11 // pred_region
          _
        $region20: #{tpu_custom_call.1} parent=11 // pred_fallthru
          _
        // Predicated region
        $region21: #{tpu_custom_call.1} parent=11 // pred_check
          %p239 = pneg %p129
        $region22: #{tpu_custom_call.1} parent=11 // pred_check_branch
          %241 = sbr.rel (%p239) target = $region24
        $region23: #{tpu_custom_call.1} parent=11 // pred_region
          _
        $region24: #{tpu_custom_call.1} parent=11 // pred_fallthru
          _
        // Predicated region
        $region25: #{tpu_custom_call.1} parent=11 // pred_check
          %p242 = pneg %p150
        $region26: #{tpu_custom_call.1} parent=11 // pred_check_branch
          %244 = sbr.rel (%p242) target = $region28
        $region27: #{tpu_custom_call.1} parent=11 // pred_region
          _
        $region28: #{tpu_custom_call.1} parent=11 // pred_fallthru
          _
        // Predicated region
        $region29: #{tpu_custom_call.1} parent=11 // pred_check
          %p245 = pneg %p171
        $region30: #{tpu_custom_call.1} parent=11 // pred_check_branch
          %247 = sbr.rel (%p245) target = $region32
        $region31: #{tpu_custom_call.1} parent=11 // pred_region
          %249 = vsyncadd [#allocation9], 0
          %s250 = sshll.u32 %s6, 4
          %s251 = int_to_ptr.hbm [resolvable:$true] %s250
          %s252 = sshll.u32 [#allocation8], 4
          %s253 = int_to_ptr.vmem [resolvable:$true] %s252
          %258 = dma.hbm_to_vmem [thread:$0]  %s251, 2048, %s253, [#allocation9], 128, 128, 8
        $region32: #{tpu_custom_call.1} parent=11 // pred_fallthru
          _
        // Predicated region
        $region33: #{tpu_custom_call.1} parent=11 // pred_check
          %p259 = pneg %p192
        $region34: #{tpu_custom_call.1} parent=11 // pred_check_branch
          %261 = sbr.rel (%p259) target = $region36
        $region35: #{tpu_custom_call.1} parent=11 // pred_region
          _
        $region36: #{tpu_custom_call.1} parent=11 // pred_fallthru
          _
      $region12: #{tpu_custom_call.1} parent=5 // pred_fallthru
        _
      %p262 = scmp.lt.s32.totalorder %s26, 6
      // Predicated region
      $region37: #{tpu_custom_call.1} parent=5 // pred_check
        %p263 = pneg %p262
      $region38: #{tpu_custom_call.1} parent=5 // pred_check_branch
        %265 = sbr.rel (%p263) target = $region40
      $region39: #{tpu_custom_call.1} parent=5 // pred_region
        // Predicated region
        $region41: #{tpu_custom_call.1} parent=39 // pred_check
          %p266 = pneg %p60
        $region42: #{tpu_custom_call.1} parent=39 // pred_check_branch
          %268 = sbr.rel (%p266) target = $region44
        $region43: #{tpu_custom_call.1} parent=39 // pred_region
          %s269 = smul.u32 2, %s34
          %p270 = scmp.lt.s32.totalorder %s33, 2
          %s271 = scalar_select %p270, %s33, 2
          %p272 = scmp.lt.s32.totalorder %s269, 3
          %s273 = scalar_select %p272, %s269, 3
          %s274 = smul.addr %s271, 4
          %s275 = sadd.s32 %s273, %s274
          %s276 = smul.addr %s275, 8
          %s277 = scalar_lea.vmem %s1, %s276
          %s278 = smul.u32 2, %s34
        $region44: #{tpu_custom_call.1} parent=39 // pred_fallthru
          _
      $region40: #{tpu_custom_call.1} parent=5 // pred_fallthru
        _
      %p279 = scmp.le.s32.totalorder 1, %s26
      %p280 = scmp.lt.s32.totalorder %s26, 7
      %p281 = pnand %p279, %p280
      %p282 = pneg %p281
      // Predicated region
      $region45: #{tpu_custom_call.1} parent=5 // pred_check
        _
      $region46: #{tpu_custom_call.1} parent=5 // pred_check_branch
        %284 = sbr.rel (%p281) target = $region48
      $region47: #{tpu_custom_call.1} parent=5 // pred_region
        %s285 = ssub.s32 %s26, 1
        // Predicated region
        $region49: #{tpu_custom_call.1} parent=47 // pred_check
          %p286 = pneg %p171
        $region50: #{tpu_custom_call.1} parent=47 // pred_check_branch
          %288 = sbr.rel (%p286) target = $region52
        $region51: #{tpu_custom_call.1} parent=47 // pred_region
          %290 = dma.done [#allocation9], 2048
        $region52: #{tpu_custom_call.1} parent=47 // pred_fallthru
          _
        %s291 = smul.u32 2, %s36
        %p292 = scmp.lt.s32.totalorder %s35, 2
        %s293 = scalar_select %p292, %s35, 2
        %p294 = scmp.lt.s32.totalorder %s291, 3
        %s295 = scalar_select %p294, %s291, 3
        %s296 = smul.addr %s293, 4
        %s297 = sadd.s32 %s295, %s296
        %s298 = smul.addr %s297, 8
        %s299 = scalar_lea.vmem %s1, %s298
        %p300 = pneg %p66
        %p301 = pneg %p63
        %p302 = pneg %p87
        %p303 = pneg %p84
        %p304 = pneg %p108
        %p305 = pneg %p105
        %p306 = pneg %p129
        %p307 = pneg %p126
        %p308 = pneg %p150
        %p309 = pneg %p147
        %p310 = pneg %p171
        %p311 = pneg %p168
        %p312 = pneg %p192
        %p313 = pneg %p189
        %p314 = pneg %p218
        %p315 = pneg %p215
        %s316 = sand.u32 %s205, 1
        %s317 = scalar_lea.sflag [#allocation10], %s316
        %s318 = sand.u32 %s205, 1
        %s319 = smul.addr %s318, 3
        %s320 = scalar_lea.vmem [#allocation11], %s319
        %s321 = smul.u32 2, %s36
        %p322 = scmp.lt.s32.totalorder %s35, 2
        %s323 = scalar_select %p322, %s35, 2
        %p324 = scmp.lt.s32.totalorder %s321, 3
        %s325 = scalar_select %p324, %s321, 3
        %s326 = smul.addr %s323, 4
        %s327 = sadd.s32 %s325, %s326
        %s328 = smul.addr %s327, 8
        %s329 = scalar_lea.vmem %s1, %s328
        %s330 = smul.u32 2, %s36
        %p331 = scmp.eq.s32.totalorder %s36, 0
        // Predicated region
        $region53: #{tpu_custom_call.1} parent=47 // pred_check
          %p332 = pneg %p331
        $region54: #{tpu_custom_call.1} parent=47 // pred_check_branch
          %334 = sbr.rel (%p332) target = $region56
        $region55: #{tpu_custom_call.1} parent=47 // pred_region
          %vm335 = vcmask 58368
          %336 = vst.msk [vmem:[#allocation2] sm:$0x3] %vm335, 0.0
          %337 = vst [vmem:[#allocation3] sm:$0x1] 0.0
          %338 = vst [vmem:[#allocation4] sm:$0x1] 0.0
          %339 = vst [vmem:[#allocation5] sm:$0x1] -inf
        $region56: #{tpu_custom_call.1} parent=47 // pred_fallthru
          _
        %v340 = vld [vmem:[%s329] sm:$0xff]
        %v341 = vld [vmem:[%s329 + $0x8] sm:$0xff]
        %v342 = vld [vmem:[#allocation2] sm:$0x3]
        %vm345 = vcmask 1041408
        %v346 = vrot.slane %v340, 6
        %v347 = vrot.slane %v341, 6
        %v348 = vsel %vm345, %v346, %v347
        %v350 = vsel %vm345, %v342, %v346
        %v351 = vld [vmem:[%s2] sm:$0xff]
        %v352 = vld [vmem:[%s3] sm:$0xff]
        %vm354 = vcmask 1046528
        %v355 = vrot.slane %v350, 1
        %v356 = vrot.slane %v348, 1
        %v357 = vsel %vm354, %v355, %v356
        %v358 = vrot.slane %v347, 1
        %v359 = vsel %vm354, %v356, %v358
        %vm360 = vcmask 64512
        %v361 = vsel %vm360, %v357, 0
        %v363 = vsel %vm360, %v359, 0
        %365 = vmatpush.msra.mxu0 0.0
        %366 = vmatpush.msra.mxu0 0.0
        %367 = vmatpush.msra.mxu0 0.0
        %368 = vmatpush.msra.mxu0 0.0
        %369 = vmatpush.msra.mxu0 0.0
        %370 = vmatpush.msra.mxu0 0.0
        %371 = vmatpush.msra.mxu0 0.0
        %372 = vmatpush.msra.mxu0 0.0
        %373 = vmatpush.msra.mxu0 0.0
        %374 = vmatpush.msra.mxu0 0.0
        %375 = vmatpush.msra.mxu0 0.0
        %376 = vmatpush.msra.mxu0 0.0
        %377 = vmatpush.msra.mxu0 0.0
        %378 = vmatpush.msra.mxu0 0.0
        %379 = vmatpush.msra.mxu0 0.0
        %380 = vmatpush.msra.mxu0 %v352
        %381 = vmatmul.f32.gmra.mxu0 %v361
        %v382 = vpop.f32.mrf.mxu0
        %v383 = vadd.f32 0.0, %v382
        %384 = vmatmul.f32.gmra.mxu0 %v363
        %v385 = vpop.f32.mrf.mxu0
        %v386 = vadd.f32 0.0, %v385
        %387 = vdwg.mxu0
        %v388 = vsel %vm360, %v350, 0
        %v390 = vsel %vm360, %v348, 0
        %392 = vmatpush.msra.mxu0 0.0
        %393 = vmatpush.msra.mxu0 0.0
        %394 = vmatpush.msra.mxu0 0.0
        %395 = vmatpush.msra.mxu0 0.0
        %396 = vmatpush.msra.mxu0 0.0
        %397 = vmatpush.msra.mxu0 0.0
        %398 = vmatpush.msra.mxu0 0.0
        %399 = vmatpush.msra.mxu0 0.0
        %400 = vmatpush.msra.mxu0 0.0
        %401 = vmatpush.msra.mxu0 0.0
        %402 = vmatpush.msra.mxu0 0.0
        %403 = vmatpush.msra.mxu0 0.0
        %404 = vmatpush.msra.mxu0 0.0
        %405 = vmatpush.msra.mxu0 0.0
        %406 = vmatpush.msra.mxu0 0.0
        %407 = vmatpush.msra.mxu0 %v351
        %408 = vmatmul.f32.gmra.mxu0 %v388
        %v409 = vpop.f32.mrf.mxu0
        %v410 = vadd.f32 %v383, %v409
        %411 = vmatmul.f32.gmra.mxu0 %v390
        %v412 = vpop.f32.mrf.mxu0
        %v413 = vadd.f32 %v386, %v412
        %414 = vdwg.mxu0
        %v415 = vld [vmem:[%s4] sm:$0xff]
        %vm416 = vcmask 1045504
        %v417 = vrot.slane %v350, 2
        %v418 = vrot.slane %v348, 2
        %v419 = vsel %vm416, %v417, %v418
        %v420 = vrot.slane %v347, 2
        %v421 = vsel %vm416, %v418, %v420
        %v422 = vsel %vm360, %v419, 0
        %v424 = vsel %vm360, %v421, 0
        %426 = vmatpush.msra.mxu0 0.0
        %427 = vmatpush.msra.mxu0 0.0
        %428 = vmatpush.msra.mxu0 0.0
        %429 = vmatpush.msra.mxu0 0.0
        %430 = vmatpush.msra.mxu0 0.0
        %431 = vmatpush.msra.mxu0 0.0
        %432 = vmatpush.msra.mxu0 0.0
        %433 = vmatpush.msra.mxu0 0.0
        %434 = vmatpush.msra.mxu0 0.0
        %435 = vmatpush.msra.mxu0 0.0
        %436 = vmatpush.msra.mxu0 0.0
        %437 = vmatpush.msra.mxu0 0.0
        %438 = vmatpush.msra.mxu0 0.0
        %439 = vmatpush.msra.mxu0 0.0
        %440 = vmatpush.msra.mxu0 0.0
        %441 = vmatpush.msra.mxu0 %v415
        %442 = vmatmul.f32.gmra.mxu0 %v422
        %v443 = vpop.f32.mrf.mxu0
        %v444 = vadd.f32 0.0, %v443
        %445 = vmatmul.f32.gmra.mxu0 %v424
        %v446 = vpop.f32.mrf.mxu0
        %v447 = vadd.f32 0.0, %v446
        %448 = vdwg.mxu0
        %v449 = vadd.f32 %v410, %v444
        %v450 = vadd.f32 %v413, %v447
        %v451 = vld [vmem:[%s5] sm:$0x1]
        %v453 = vperm.slane %v451, 0
        %v455 = vadd.f32 %v449, %v453
        %v456 = vadd.f32 %v450, %v453
        %v457 = vmax.f32 %v455, 0.0
        %v458 = vmax.f32 %v456, 0.0
        %v459 = vld [vmem:[#allocation8] sm:$0xff]
        %v460 = vld [vmem:[#allocation8 + $0x8] sm:$0xff]
        %v461 = vld [vmem:[#allocation8 + $0x10] sm:$0xff]
        %v462 = vld [vmem:[#allocation8 + $0x18] sm:$0xff]
        %v463 = vld [vmem:[#allocation8 + $0x20] sm:$0xff]
        %v464 = vld [vmem:[#allocation8 + $0x28] sm:$0xff]
        %v465 = vld [vmem:[#allocation8 + $0x30] sm:$0xff]
        %v466 = vld [vmem:[#allocation8 + $0x38] sm:$0xff]
        %v467 = vld [vmem:[#allocation8 + $0x40] sm:$0xff]
        %v468 = vld [vmem:[#allocation8 + $0x48] sm:$0xff]
        %v469 = vld [vmem:[#allocation8 + $0x50] sm:$0xff]
        %v470 = vld [vmem:[#allocation8 + $0x58] sm:$0xff]
        %v471 = vld [vmem:[#allocation8 + $0x60] sm:$0xff]
        %v472 = vld [vmem:[#allocation8 + $0x68] sm:$0xff]
        %v473 = vld [vmem:[#allocation8 + $0x70] sm:$0xff]
        %v474 = vld [vmem:[#allocation8 + $0x78] sm:$0xff]
        %v475 = vld [vmem:[%s7] sm:$0x1]
        %v477 = vperm.slane %v475, 0
        %479 = vmatpush.msra.mxu0 %v474
        %480 = vmatpush.msra.mxu0 %v473
        %481 = vmatpush.msra.mxu0 %v472
        %482 = vmatpush.msra.mxu0 %v471
        %483 = vmatpush.msra.mxu0 %v470
        %484 = vmatpush.msra.mxu0 %v469
        %485 = vmatpush.msra.mxu0 %v468
        %486 = vmatpush.msra.mxu0 %v467
        %487 = vmatpush.msra.mxu0 %v466
        %488 = vmatpush.msra.mxu0 %v465
        %489 = vmatpush.msra.mxu0 %v464
        %490 = vmatpush.msra.mxu0 %v463
        %491 = vmatpush.msra.mxu0 %v462
        %492 = vmatpush.msra.mxu0 %v461
        %493 = vmatpush.msra.mxu0 %v460
        %494 = vmatpush.msra.mxu0 %v459
        %495 = vmatmul.f32.gmra.mxu0 %v457
        %v496 = vpop.f32.mrf.mxu0
        %v497 = vadd.f32 %v477, %v496
        %498 = vmatmul.f32.gmra.mxu0 %v458
        %v499 = vpop.f32.mrf.mxu0
        %v500 = vadd.f32 %v477, %v499
        %501 = vdwg.mxu0
        %vm502 = vcmask 64518
        %503 = vst.msk [vmem:[#allocation2 - $0x6] sm:$0xc0] %vm502, %v341
        %s504 = sld [smem:[#allocation7 + %s35]]
        %v505 = vlaneseq
        %v506 = vshrl.u32 %v505, 7
        %v507 = vadd.s32 %v506, 8
        %s508 = smul.u32 %s36, 16
        %s509 = ssub.s32 %s508, 2
        %v510 = vstv %s509
        %v511 = vadd.s32 %v506, %v510
        %v512 = vadd.s32 %v507, %v510
        %vm513 = vcmp.ge.s32.totalorder %v511, 0
        %vm514 = vcmp.ge.s32.totalorder %v512, 0
        %v515 = vstv %s504
        %vm516 = vcmp.lt.s32.totalorder %v511, %v515
        %vm517 = vcmp.lt.s32.totalorder %v512, %v515
        %vm518 = vmand %vm513, %vm516
        %vm519 = vmand %vm514, %vm517
        %v520 = vsel %vm518, 1, 0
        %v521 = vsel %vm519, 1, 0
        %vm522 = vcmp.eq.s32.totalorder %v520, 1
        %vm523 = vcmp.eq.s32.totalorder %v521, 1
        %v524 = vsel %vm522, %v497, 0.0
        %v525 = vsel %vm523, %v500, 0.0
        %v526 = vld [vmem:[#allocation3] sm:$0x1]
        %v527 = vadd.f32 %v524, %v525
        %v528 = vrot.slane %v527, 4
        %v529 = vadd.f32 %v527, %v528
        %v530 = vrot.slane %v529, 2
        %v531 = vadd.f32 %v529, %v530
        %v532 = vrot.slane %v531, 1
        %v533 = vadd.f32 %v531, %v532
        %v534 = vadd.f32 %v526, %v533
        %535 = vst [vmem:[#allocation3] sm:$0x1] %v534
        %v536 = vld [vmem:[#allocation4] sm:$0x1]
        %v537 = vmul.f32 %v524, %v524
        %v538 = vmul.f32 %v525, %v525
        %v539 = vadd.f32 %v537, %v538
        %v540 = vrot.slane %v539, 4
        %v541 = vadd.f32 %v539, %v540
        %v542 = vrot.slane %v541, 2
        %v543 = vadd.f32 %v541, %v542
        %v544 = vrot.slane %v543, 1
        %v545 = vadd.f32 %v543, %v544
        %v546 = vadd.f32 %v536, %v545
        %547 = vst [vmem:[#allocation4] sm:$0x1] %v546
        %v548 = vld [vmem:[#allocation5] sm:$0x1]
        %v549 = vsel %vm522, %v497, -inf
        %v550 = vsel %vm523, %v500, -inf
        %v551 = vmax.f32 %v549, %v550
        %v552 = vrot.slane %v551, 4
        %v553 = vmax.f32 %v551, %v552
        %v554 = vrot.slane %v553, 2
        %v555 = vmax.f32 %v553, %v554
        %v556 = vrot.slane %v555, 1
        %v557 = vmax.f32 %v555, %v556
        %v558 = vmax.f32 %v548, %v557
        %559 = vst [vmem:[#allocation5] sm:$0x1] %v558
        %p560 = scmp.eq.s32.totalorder %s36, 1
        // Predicated region
        $region57: #{tpu_custom_call.1} parent=47 // pred_check
          %p561 = pneg %p560
        $region58: #{tpu_custom_call.1} parent=47 // pred_check_branch
          %563 = sbr.rel (%p561) target = $region60
        $region59: #{tpu_custom_call.1} parent=47 // pred_region
          %s564 = scvt.s32.f32 %s504
          %v565 = vld [vmem:[#allocation3] sm:$0x1]
          %v566 = vstv %s564
          %v567 = vrcp.pop %v566
          %v568 = vmul.f32 %v566, %v567
          %v569 = vsub.f32 1.0, %v568
          %v570 = vmul.f32 %v567, %v569
          %v571 = vadd.f32 %v567, %v570
          %vm572 = vweird.f32 %v566
          %vm573 = vweird.f32 %v567
          %vm574 = vmor %vm572, %vm573
          %v575 = vsel %vm574, %v567, %v571
          %v576 = vand.u32 2147483647, %v566
          %vm577 = vcmp.eq.f32.partialorder %v576, 8.507059e+37
          %v578 = vand.u32 %v566, 2147483648
          %v579 = vor.u32 1.1754944e-38, %v578
          %v580 = vsel %vm577, %v579, %v575
          %v581 = vmul.f32 %v565, %v580
          %s582 = ssub.f32 %s564, 1.0
          %s583 = smax.f32 %s582, 1.0
          %v584 = vld [vmem:[#allocation4] sm:$0x1]
          %v585 = vmul.f32 %v565, %v581
          %v586 = vsub.f32 %v584, %v585
          %v587 = vstv %s583
          %v588 = vrcp.pop %v587
          %v589 = vmul.f32 %v587, %v588
          %v590 = vsub.f32 1.0, %v589
          %v591 = vmul.f32 %v588, %v590
          %v592 = vadd.f32 %v588, %v591
          %vm593 = vweird.f32 %v587
          %vm594 = vweird.f32 %v588
          %vm595 = vmor %vm593, %vm594
          %v596 = vsel %vm595, %v588, %v592
          %v597 = vand.u32 2147483647, %v587
          %vm598 = vcmp.eq.f32.partialorder %v597, 8.507059e+37
          %v599 = vand.u32 %v587, 2147483648
          %v600 = vor.u32 1.1754944e-38, %v599
          %v601 = vsel %vm598, %v600, %v596
          %v602 = vmul.f32 %v586, %v601
          %v603 = vmax.f32 %v602, 0.0
          %v604 = vrsqrt.pop %v603
          %v605 = vmul.f32 %v604, %v603
          %v606 = vmul.f32 %v605, %v604
          %v607 = vmul.f32 0.5, %v606
          %v608 = vsub.f32 1.5, %v607
          %v609 = vmul.f32 %v604, %v608
          %v610 = vmul.f32 %v603, %v609
          %vm611 = vcmp.eq.f32.partialorder %v603, inf
          %v612 = vsel %vm611, %v603, %v610
          %vm613 = vcmp.eq.f32.partialorder %v603, 0.0
          %v614 = vand.u32 %v603, 2147483648
          %v615 = vsel %vm613, %v614, %v612
          %v616 = vld [vmem:[#allocation5] sm:$0x1]
          %v620 = vrot.slane %v615, 7
          %v621 = vrot.slane %v616, 6
          %vm622 = vcmask 1040384
          %v623 = vsel %vm622, %v581, %v620
          %v624 = vsel %vm345, %v623, %v621
          %v626 = vlaneseq
          %vm627 = vcmp.ge.s32.totalorder %v626, 0
          %vm628 = vcmp.lt.s32.totalorder %v626, 384
          %vm629 = vmand %vm627, %vm628
          %630 = vst.msk [vmem:[%s320] sm:$0x7] %vm629, %v624
        $region60: #{tpu_custom_call.1} parent=47 // pred_fallthru
          _
        %s631 = sand.u32 %s205, 1
        %s632 = scalar_lea.sflag [#allocation10], %s631
        %s633 = sand.u32 %s205, 1
        %s634 = smul.addr %s633, 3
        %s635 = scalar_lea.vmem [#allocation11], %s634
        // Predicated region
        $region61: #{tpu_custom_call.1} parent=47 // pred_check
          %p636 = pneg %p215
        $region62: #{tpu_custom_call.1} parent=47 // pred_check_branch
          %638 = sbr.rel (%p636) target = $region64
        $region63: #{tpu_custom_call.1} parent=47 // pred_region
          %640 = vsyncadd %s632, 0
          %s641 = smul.addr %s35, 3
          %s642 = scalar_lea.hbm %s8, %s641
          %s644 = sshll.u32 %s635, 4
          %s645 = int_to_ptr.vmem [resolvable:$true] %s644
          %s646 = sshll.u32 %s642, 4
          %s647 = int_to_ptr.hbm [resolvable:$true] %s646
          %649 = dma.vmem_to_hbm [thread:$0]  %s645, 48, %s647, %s632
        $region64: #{tpu_custom_call.1} parent=47 // pred_fallthru
          _
      $region48: #{tpu_custom_call.1} parent=5 // pred_fallthru
        _
      %p650 = scmp.le.s32.totalorder 2, %s26
      // Predicated region
      $region65: #{tpu_custom_call.1} parent=5 // pred_check
        %p651 = pneg %p650
      $region66: #{tpu_custom_call.1} parent=5 // pred_check_branch
        %653 = sbr.rel (%p651) target = $region68
      $region67: #{tpu_custom_call.1} parent=5 // pred_region
        %s654 = ssub.s32 %s26, 2
        // Predicated region
        $region69: #{tpu_custom_call.1} parent=67 // pred_check
          %p655 = pneg %p221
        $region70: #{tpu_custom_call.1} parent=67 // pred_check_branch
          %657 = sbr.rel (%p655) target = $region72
        $region71: #{tpu_custom_call.1} parent=67 // pred_region
          %s658 = sand.u32 %s206, 1
          %s659 = scalar_lea.sflag [#allocation10], %s658
          %s660 = sand.u32 %s206, 1
          %s661 = smul.addr %s660, 3
          %s662 = scalar_lea.vmem [#allocation11], %s661
          %664 = dma.done %s659, 48
        $region72: #{tpu_custom_call.1} parent=67 // pred_fallthru
          _
      $region68: #{tpu_custom_call.1} parent=5 // pred_fallthru
        _
    $region6: #{tpu_custom_call.1} parent=1 // loop_footer
      %s30 = sadd.s32 1, %s26
    $region7: #{tpu_custom_call.1} parent=1 // loop_footer_branch
      %25 = sbr.rel target = $region3
    $region8: #{tpu_custom_call.1} parent=1 // loop_exit
      _
    %665 = vsyncpa [#allocation9], 1
    %s666 = scalar_lea.sflag [#allocation9], 1
    %667 = vsyncpa %s666, 1
    %668 = vsyncpa [#allocation10], 1
    %s669 = scalar_lea.sflag [#allocation10], 1
    %670 = vsyncpa %s669, 1

</llo_original>
